<compile_context>
chip_gen: v5e
topology: v5e:2x2
jax: 0.10.0
libtpu: 0.0.40
codegen_flags: <defaults>
</compile_context>

<pallas_src>
import jax
import jax.numpy as jnp
from jax.experimental import pallas as pl
from jax.experimental.pallas import tpu as pltpu

NEMB = 112
HIDDEN = 4 * NEMB            # 448
DROPOUT_P = 0.3
_KEEP_SCALE = 1.0 / (1.0 - DROPOUT_P)
# signed-int32 threshold: P(i32 < T) == DROPOUT_P for i32 uniform over [-2^31, 2^31)
_DROP_THRESHOLD_I32 = int(round(DROPOUT_P * (1 << 32))) - (1 << 31)   # -858993459


def _round_up(n, m):
    return (n + m - 1) // m * m


def _ffn_core(x_ref, w1_ref, b1_ref, w2_ref, b2_ref):
    """x(tm,DP) @ W1(DP,HP) + b1 -> ReLU -> @ W2(HP,DP) + b2, f32 accumulate."""
    mxu_dtype = w1_ref.dtype
    x = x_ref[...].astype(mxu_dtype)
    h = jnp.dot(x, w1_ref[...], preferred_element_type=jnp.float32)
    h = jnp.maximum(h + b1_ref[...], 0.0)                  # f32 elementwise
    y = jnp.dot(h.astype(mxu_dtype), w2_ref[...],
                preferred_element_type=jnp.float32)
    return y + b2_ref[...]                                  # f32 elementwise


def ffn_kernel_eval(x_ref, w1_ref, b1_ref, w2_ref, b2_ref, o_ref):
    y = _ffn_core(x_ref, w1_ref, b1_ref, w2_ref, b2_ref)
    o_ref[...] = y.astype(o_ref.dtype)


def ffn_kernel_train(x_ref, w1_ref, b1_ref, w2_ref, b2_ref, bits_ref, o_ref):
    y = _ffn_core(x_ref, w1_ref, b1_ref, w2_ref, b2_ref)
    # inverted dropout via integer-threshold compare on raw random bits
    keep = bits_ref[...] >= jnp.int32(_DROP_THRESHOLD_I32)
    y = jnp.where(keep, y * jnp.float32(_KEEP_SCALE), 0.0)
    o_ref[...] = y.astype(o_ref.dtype)


def init_params(key, nemb=NEMB, dtype=jnp.float32):
    """Mimics PyTorch nn.Linear init: uniform(-1/sqrt(fan_in), +1/sqrt(fan_in)).
    Weights stored transposed vs torch: (in_features, out_features)."""
    hidden = 4 * nemb
    k1, k2, k3, k4 = jax.random.split(key, 4)
    bnd1 = 1.0 / (nemb ** 0.5)
    bnd2 = 1.0 / (hidden ** 0.5)
    w1 = jax.random.uniform(k1, (nemb, hidden), dtype, -bnd1, bnd1)
    b1 = jax.random.uniform(k2, (1, hidden), dtype, -bnd1, bnd1)
    w2 = jax.random.uniform(k3, (hidden, nemb), dtype, -bnd2, bnd2)
    b2 = jax.random.uniform(k4, (1, nemb), dtype, -bnd2, bnd2)
    return w1, b1, w2, b2


def feedforward(x, params, *, training=False, rng=None, tm=512,
                mxu_dtype=jnp.bfloat16):
    """Applies the FFN over the last axis of x (any leading batch dims)."""
    w1, b1, w2, b2 = params
    D = x.shape[-1]
    H = w1.shape[1]
    assert w1.shape == (D, H) and w2.shape == (H, D)

    # --- lane-dense padding: last dims -> multiples of 128 -------------------
    DP = _round_up(D, 128)      # 112 -> 128
    HP = _round_up(H, 128)      # 448 -> 512
    w1p = jnp.pad(w1, ((0, DP - D), (0, HP - H))).astype(mxu_dtype)
    b1p = jnp.pad(b1.reshape(1, H), ((0, 0), (0, HP - H))).astype(jnp.float32)
    w2p = jnp.pad(w2, ((0, HP - H), (0, DP - D))).astype(mxu_dtype)
    b2p = jnp.pad(b2.reshape(1, D), ((0, 0), (0, DP - D))).astype(jnp.float32)

    # --- row tiling: big tiles, pad row count so any M works -----------------
    x2 = x.reshape(-1, D)
    M = x2.shape[0]
    tm_eff = min(_round_up(tm, 8), _round_up(M, 8))
    MP = _round_up(M, tm_eff)
    x2p = jnp.pad(x2, ((0, MP - M), (0, DP - D)))
    n_steps = MP // tm_eff

    x_spec = pl.BlockSpec((tm_eff, DP), lambda i: (i, 0))
    w1_spec = pl.BlockSpec((DP, HP), lambda i: (0, 0))     # resident weights
    b1_spec = pl.BlockSpec((1, HP), lambda i: (0, 0))
    w2_spec = pl.BlockSpec((HP, DP), lambda i: (0, 0))
    b2_spec = pl.BlockSpec((1, DP), lambda i: (0, 0))
    out_spec = pl.BlockSpec((tm_eff, DP), lambda i: (i, 0))

    elem = jnp.dtype(x.dtype).itemsize
    w_elem = jnp.dtype(mxu_dtype).itemsize
    flops = 2 * MP * (DP * HP + HP * DP)
    bytes_accessed = (MP * DP * elem * 2                    # x in + out
                      + (DP * HP + HP * DP) * w_elem        # weights
                      + (HP + DP) * 4)                      # biases
    if training:
        bytes_accessed += MP * DP * 4                       # dropout bits

    if training:
        if rng is None:
            rng = jax.random.PRNGKey(0)
        bits_u32 = jax.random.bits(rng, (MP, DP), dtype=jnp.uint32)
        bits = jax.lax.bitcast_convert_type(bits_u32, jnp.int32)
        kernel = ffn_kernel_train
        in_specs = [x_spec, w1_spec, b1_spec, w2_spec, b2_spec,
                    pl.BlockSpec((tm_eff, DP), lambda i: (i, 0))]
        args = (x2p, w1p, b1p, w2p, b2p, bits)
    else:
        kernel = ffn_kernel_eval
        in_specs = [x_spec, w1_spec, b1_spec, w2_spec, b2_spec]
        args = (x2p, w1p, b1p, w2p, b2p)

    out = pl.pallas_call(
        kernel,
        out_shape=jax.ShapeDtypeStruct((MP, DP), x.dtype),
        grid=(n_steps,),
        in_specs=in_specs,
        out_specs=out_spec,
        compiler_params=pltpu.CompilerParams(
            dimension_semantics=("parallel",)),              # megacore-friendly
        cost_estimate=pl.CostEstimate(flops=int(flops), transcendentals=0,
                                      bytes_accessed=int(bytes_accessed)),
    )(*args)

    return out[:M, :D].reshape(x.shape)


if __name__ == "__main__":
    key = jax.random.PRNGKey(0)
    kx, kp, kd = jax.random.split(key, 3)

    # small shapes consistent with the module: (batch=2, seq=8, nemb=112)
    x = jax.random.normal(kx, (2, 8, NEMB), dtype=jnp.float32)
    params = init_params(kp)
    w1, b1, w2, b2 = params

    # plain-JAX reference (eval mode: dropout == identity)
    ref = jnp.maximum(x @ w1 + b1[0], 0.0) @ w2 + b2[0]

    # eval mode with f32 MXU operands: tighter check
    y32 = jax.block_until_ready(
        feedforward(x, params, training=False, mxu_dtype=jnp.float32))
    assert y32.shape == x.shape
    assert jnp.allclose(y32, ref, atol=1e-2, rtol=1e-2), "f32 path mismatch"

    # eval mode with default bf16 MXU operands: looser check
    ybf = jax.block_until_ready(feedforward(x, params, training=False))
    assert ybf.shape == x.shape
    assert jnp.allclose(ybf, ref, atol=6e-2, rtol=6e-2), "bf16 path mismatch"

    # train mode: inverted dropout (keep prob 0.7, scale 1/0.7)
    yt = jax.block_until_ready(feedforward(x, params, training=True, rng=kd))
    assert yt.shape == x.shape
    assert bool(jnp.all(jnp.isfinite(yt)))
    zero_frac = float(jnp.mean(yt == 0.0))
    assert 0.15 < zero_frac < 0.45, f"unexpected dropout rate {zero_frac}"
    kept = yt != 0.0
    assert jnp.allclose(jnp.where(kept, yt, 0.0),
                        jnp.where(kept, ybf * _KEEP_SCALE, 0.0),
                        atol=1e-1, rtol=1e-1), "kept elements not scaled right"

    print("KERNEL_OK")
</pallas_src>

<mosaic_0001>
module attributes {stable_mosaic.version = 11 : i64} {
  func.func @ffn_kernel_eval(%arg0: i32, %arg1: memref<16x128xf32, #tpu.memory_space<vmem>>, %arg2: memref<128x512xf32, #tpu.memory_space<vmem>>, %arg3: memref<1x512xf32, #tpu.memory_space<vmem>>, %arg4: memref<512x128xf32, #tpu.memory_space<vmem>>, %arg5: memref<1x128xf32, #tpu.memory_space<vmem>>, %arg6: memref<16x128xf32, #tpu.memory_space<vmem>>) attributes {dimension_semantics = [#tpu.dimension_semantics<parallel>], iteration_bounds = array<i64: 1>, scalar_prefetch = 0 : i64, scratch_operands = 0 : i64, tpu.core_type = #tpu.core_type<tc>, window_params = [{transform_indices = @transform_0, window_bounds = array<i64: 16, 128>}, {pipeline_mode = #tpu.pipeline_mode<synchronous>, transform_indices = @transform_1, window_bounds = array<i64: 128, 512>}, {pipeline_mode = #tpu.pipeline_mode<synchronous>, transform_indices = @transform_2, window_bounds = array<i64: 1, 512>}, {pipeline_mode = #tpu.pipeline_mode<synchronous>, transform_indices = @transform_3, window_bounds = array<i64: 512, 128>}, {pipeline_mode = #tpu.pipeline_mode<synchronous>, transform_indices = @transform_4, window_bounds = array<i64: 1, 128>}, {transform_indices = @transform_5, window_bounds = array<i64: 16, 128>}]} {
    %c0 = arith.constant 0 : index
    %c0_0 = arith.constant 0 : index
    %0 = vector.load %arg1[%c0, %c0_0] : memref<16x128xf32, #tpu.memory_space<vmem>>, vector<16x128xf32>
    %c0_1 = arith.constant 0 : index
    %c0_2 = arith.constant 0 : index
    %1 = vector.load %arg2[%c0_1, %c0_2] : memref<128x512xf32, #tpu.memory_space<vmem>>, vector<128x512xf32>
    %cst = arith.constant dense<0.000000e+00> : vector<16x512xf32>
    %2 = tpu.matmul %0, %1, %cst {dimension_numbers = #tpu.dot_dimension_numbers<[1], [0], [0], [1], [0, 0, 1, 1], [], []>} : vector<16x128xf32>, vector<128x512xf32>, vector<16x512xf32> -> vector<16x512xf32>
    %c0_3 = arith.constant 0 : index
    %c0_4 = arith.constant 0 : index
    %3 = vector.load %arg3[%c0_3, %c0_4] : memref<1x512xf32, #tpu.memory_space<vmem>>, vector<1x512xf32>
    %4 = vector.broadcast %3 : vector<1x512xf32> to vector<16x512xf32>
    %5 = arith.addf %2, %4 : vector<16x512xf32>
    %cst_5 = arith.constant 0.000000e+00 : f32
    %6 = vector.broadcast %cst_5 : f32 to vector<16x512xf32>
    %7 = arith.maximumf %5, %6 : vector<16x512xf32>
    %c0_6 = arith.constant 0 : index
    %c0_7 = arith.constant 0 : index
    %8 = vector.load %arg4[%c0_6, %c0_7] : memref<512x128xf32, #tpu.memory_space<vmem>>, vector<512x128xf32>
    %cst_8 = arith.constant dense<0.000000e+00> : vector<16x128xf32>
    %9 = tpu.matmul %7, %8, %cst_8 {dimension_numbers = #tpu.dot_dimension_numbers<[1], [0], [0], [1], [0, 0, 1, 1], [], []>} : vector<16x512xf32>, vector<512x128xf32>, vector<16x128xf32> -> vector<16x128xf32>
    %c0_9 = arith.constant 0 : index
    %c0_10 = arith.constant 0 : index
    %10 = vector.load %arg5[%c0_9, %c0_10] : memref<1x128xf32, #tpu.memory_space<vmem>>, vector<1x128xf32>
    %11 = vector.broadcast %10 : vector<1x128xf32> to vector<16x128xf32>
    %12 = arith.addf %9, %11 : vector<16x128xf32>
    %c0_11 = arith.constant 0 : index
    %c0_12 = arith.constant 0 : index
    %13 = vector.load %arg6[%c0_11, %c0_12] : memref<16x128xf32, #tpu.memory_space<vmem>>, vector<16x128xf32>
    tpu.vector_store %arg6[%c0_11, %c0_12], %12 {strides = array<i32>} : memref<16x128xf32, #tpu.memory_space<vmem>>, vector<16x128xf32>,
    return
  }
  func.func @transform_0(%arg0: i32) -> (i32, i32) {
    %c0_i32 = arith.constant 0 : i32
    %c0_i32_0 = arith.constant 0 : i32
    return %arg0, %c0_i32 : i32, i32
  }
  func.func @transform_1(%arg0: i32) -> (i32, i32) {
    %c0_i32 = arith.constant 0 : i32
    %c0_i32_0 = arith.constant 0 : i32
    %c0_i32_1 = arith.constant 0 : i32
    return %c0_i32, %c0_i32_0 : i32, i32
  }
  func.func @transform_2(%arg0: i32) -> (i32, i32) {
    %c0_i32 = arith.constant 0 : i32
    %c0_i32_0 = arith.constant 0 : i32
    %c0_i32_1 = arith.constant 0 : i32
    return %c0_i32, %c0_i32_0 : i32, i32
  }
  func.func @transform_3(%arg0: i32) -> (i32, i32) {
    %c0_i32 = arith.constant 0 : i32
    %c0_i32_0 = arith.constant 0 : i32
    %c0_i32_1 = arith.constant 0 : i32
    return %c0_i32, %c0_i32_0 : i32, i32
  }
  func.func @transform_4(%arg0: i32) -> (i32, i32) {
    %c0_i32 = arith.constant 0 : i32
    %c0_i32_0 = arith.constant 0 : i32
    %c0_i32_1 = arith.constant 0 : i32
    return %c0_i32, %c0_i32_0 : i32, i32
  }
  func.func @transform_5(%arg0: i32) -> (i32, i32) {
    %c0_i32 = arith.constant 0 : i32
    %c0_i32_0 = arith.constant 0 : i32
    return %arg0, %c0_i32 : i32, i32
  }
}

</mosaic_0001>

<llo_original>
// kernel: tpu_custom_call.1
$region0: #{tpu_custom_call.1}
  #allocation0 [shape = 'u32[]', space=smem, size = 0x4, offset = 0x4, fixed_abs, tag = 'smem constant byte address 0x4 - core index']
  #allocation1 [shape = 'u32[72,128]{1,0:T(1,128)}', space=vmem, size = 0x9000, scoped, tag = 'internal scratch']
  %s0 = inlined_call_operand.hbm [shape: f32[16,128], index: 0, kind: input, shape index: {}]
  %s1 = inlined_call_operand.hbm [shape: f32[128,512], index: 1, kind: input, shape index: {}]
  %s2 = inlined_call_operand.hbm [shape: f32[1,512], index: 2, kind: input, shape index: {}]
  %s3 = inlined_call_operand.hbm [shape: f32[512,128], index: 3, kind: input, shape index: {}]
  %s4 = inlined_call_operand.vmem [shape: f32[1,128], index: 4, kind: input, shape index: {}]
  %s5 = inlined_call_operand.hbm [shape: f32[16,128], index: 5, kind: output, shape index: {}]
  %s6 = sld [smem:[#allocation0]]
  $region46: #{tpu_custom_call.1} parent=0
    _
  %s8 = ssub.s32 1, %s6
  %s9 = scalar_select 0, %s8, %s6
  $region1: #{tpu_custom_call.1} parent=0
    #allocation2 [shape = 'u8[8192]{0}', space=vmem, size = 0x2000, scoped, tag = 'input window, operand 0, single buffered']
    #allocation3 [shape = 's32[1]{0}', space=sflag, size = 0x4, scoped, tag = 'scoped memory for tpu_custom_call.1']
    #allocation4 [shape = 's32[1]{0}', space=sflag, size = 0x4, scoped, tag = 'scoped memory for tpu_custom_call.1']
    #allocation5 [shape = 'u8[262144]{0}', space=vmem, size = 0x40000, scoped, tag = 'input window, operand 1, single buffered']
    #allocation6 [shape = 's32[1]{0}', space=sflag, size = 0x4, scoped, tag = 'scoped memory for tpu_custom_call.1']
    #allocation7 [shape = 'u8[2048]{0}', space=vmem, size = 0x800, scoped, tag = 'input window, operand 2, single buffered']
    #allocation8 [shape = 'u8[262144]{0}', space=vmem, size = 0x40000, scoped, tag = 'input window, operand 3, single buffered']
    #allocation9 [shape = 's32[1]{0}', space=sflag, size = 0x4, scoped, tag = 'scoped memory for tpu_custom_call.1']
    #allocation10 [shape = 'u8[8192]{0}', space=vmem, size = 0x2000, scoped, tag = 'output window, operand 0, single buffered']
    %10 = vsyncpa [#allocation3], 0
    %11 = vsyncpa [#allocation6], 0
    %12 = vsyncpa [#allocation9], 0
    %13 = vsyncpa [#allocation4], 0
    // Predicated region
    $region2: #{tpu_custom_call.1} parent=1 // pred_check
      _
    $region3: #{tpu_custom_call.1} parent=1 // pred_check_branch
      %15 = sbr.rel (0) target = $region5
    $region4: #{tpu_custom_call.1} parent=1 // pred_region
      %17 = vsyncadd [#allocation3], 0
      %s18 = sshll.u32 %s0, 4
      %s19 = int_to_ptr.hbm [resolvable:$true] %s18
      %s20 = sshll.u32 [#allocation2], 4
      %s21 = int_to_ptr.vmem [resolvable:$true] %s20
      %26 = dma.hbm_to_vmem [thread:$0]  %s19, 256, %s21, [#allocation3], 128, 128, 8
    $region5: #{tpu_custom_call.1} parent=1 // pred_fallthru
      _
    // Predicated region
    $region6: #{tpu_custom_call.1} parent=1 // pred_check
      _
    $region7: #{tpu_custom_call.1} parent=1 // pred_check_branch
      %28 = sbr.rel (0) target = $region9
    $region8: #{tpu_custom_call.1} parent=1 // pred_region
      %30 = vsyncadd [#allocation6], 0
      %s31 = sshll.u32 %s1, 4
      %s32 = int_to_ptr.hbm [resolvable:$true] %s31
      %s33 = sshll.u32 [#allocation5], 4
      %s34 = int_to_ptr.vmem [resolvable:$true] %s33
      %39 = dma.hbm_to_vmem [thread:$0]  %s32, 8192, %s34, [#allocation6], 512, 512, 32
    $region9: #{tpu_custom_call.1} parent=1 // pred_fallthru
      _
    // Predicated region
    $region10: #{tpu_custom_call.1} parent=1 // pred_check
      _
    $region11: #{tpu_custom_call.1} parent=1 // pred_check_branch
      %41 = sbr.rel (0) target = $region13
    $region12: #{tpu_custom_call.1} parent=1 // pred_region
      %43 = vsyncadd [#allocation6], 0
      %s45 = sshll.u32 %s2, 4
      %s46 = int_to_ptr.hbm [resolvable:$true] %s45
      %s47 = sshll.u32 [#allocation7], 4
      %s48 = int_to_ptr.vmem [resolvable:$true] %s47
      %50 = dma.hbm_to_vmem [thread:$0]  %s46, 64, %s48, [#allocation6]
    $region13: #{tpu_custom_call.1} parent=1 // pred_fallthru
      _
    // Predicated region
    $region14: #{tpu_custom_call.1} parent=1 // pred_check
      _
    $region15: #{tpu_custom_call.1} parent=1 // pred_check_branch
      %52 = sbr.rel (0) target = $region17
    $region16: #{tpu_custom_call.1} parent=1 // pred_region
      %54 = vsyncadd [#allocation9], 0
      %s55 = sshll.u32 %s3, 4
      %s56 = int_to_ptr.hbm [resolvable:$true] %s55
      %s57 = sshll.u32 [#allocation8], 4
      %s58 = int_to_ptr.vmem [resolvable:$true] %s57
      %63 = dma.hbm_to_vmem [thread:$0]  %s56, 8192, %s58, [#allocation9], 128, 128, 8
    $region17: #{tpu_custom_call.1} parent=1 // pred_fallthru
      _
    // Predicated region
    $region18: #{tpu_custom_call.1} parent=1 // pred_check
      _
    $region19: #{tpu_custom_call.1} parent=1 // pred_check_branch
      %65 = sbr.rel (0) target = $region21
    $region20: #{tpu_custom_call.1} parent=1 // pred_region
      _
    $region21: #{tpu_custom_call.1} parent=1 // pred_fallthru
      _
    // Predicated region
    $region22: #{tpu_custom_call.1} parent=1 // pred_check
      _
    $region23: #{tpu_custom_call.1} parent=1 // pred_check_branch
      %67 = sbr.rel (0) target = $region25
    $region24: #{tpu_custom_call.1} parent=1 // pred_region
      %69 = dma.done [#allocation3], 256
    $region25: #{tpu_custom_call.1} parent=1 // pred_fallthru
      _
    // Predicated region
    $region26: #{tpu_custom_call.1} parent=1 // pred_check
      _
    $region27: #{tpu_custom_call.1} parent=1 // pred_check_branch
      %71 = sbr.rel (0) target = $region29
    $region28: #{tpu_custom_call.1} parent=1 // pred_region
      %73 = dma.done [#allocation6], 8192
    $region29: #{tpu_custom_call.1} parent=1 // pred_fallthru
      _
    // Predicated region
    $region30: #{tpu_custom_call.1} parent=1 // pred_check
      _
    $region31: #{tpu_custom_call.1} parent=1 // pred_check_branch
      %75 = sbr.rel (0) target = $region33
    $region32: #{tpu_custom_call.1} parent=1 // pred_region
      %77 = dma.done [#allocation6], 64
    $region33: #{tpu_custom_call.1} parent=1 // pred_fallthru
      _
    // Predicated region
    $region34: #{tpu_custom_call.1} parent=1 // pred_check
      _
    $region35: #{tpu_custom_call.1} parent=1 // pred_check_branch
      %79 = sbr.rel (0) target = $region37
    $region36: #{tpu_custom_call.1} parent=1 // pred_region
      %81 = dma.done [#allocation9], 8192
    $region37: #{tpu_custom_call.1} parent=1 // pred_fallthru
      _
    %v82 = vld [vmem:[#allocation2] sm:$0xff]
    %v83 = vld [vmem:[#allocation2 + $0x8] sm:$0xff]
    %v84 = vld [vmem:[#allocation5] sm:$0xff]
    %v85 = vld [vmem:[#allocation5 + $0x8] sm:$0xff]
    %v86 = vld [vmem:[#allocation5 + $0x10] sm:$0xff]
    %v87 = vld [vmem:[#allocation5 + $0x18] sm:$0xff]
    %v88 = vld [vmem:[#allocation5 + $0x20] sm:$0xff]
    %v89 = vld [vmem:[#allocation5 + $0x28] sm:$0xff]
    %v90 = vld [vmem:[#allocation5 + $0x30] sm:$0xff]
    %v91 = vld [vmem:[#allocation5 + $0x38] sm:$0xff]
    %v92 = vld [vmem:[#allocation5 + $0x40] sm:$0xff]
    %v93 = vld [vmem:[#allocation5 + $0x48] sm:$0xff]
    %v94 = vld [vmem:[#allocation5 + $0x50] sm:$0xff]
    %v95 = vld [vmem:[#allocation5 + $0x58] sm:$0xff]
    %v96 = vld [vmem:[#allocation5 + $0x60] sm:$0xff]
    %v97 = vld [vmem:[#allocation5 + $0x68] sm:$0xff]
    %v98 = vld [vmem:[#allocation5 + $0x70] sm:$0xff]
    %v99 = vld [vmem:[#allocation5 + $0x78] sm:$0xff]
    %v100 = vld [vmem:[#allocation5 + $0x80] sm:$0xff]
    %v101 = vld [vmem:[#allocation5 + $0x88] sm:$0xff]
    %v102 = vld [vmem:[#allocation5 + $0x90] sm:$0xff]
    %v103 = vld [vmem:[#allocation5 + $0x98] sm:$0xff]
    %v104 = vld [vmem:[#allocation5 + $0xa0] sm:$0xff]
    %v105 = vld [vmem:[#allocation5 + $0xa8] sm:$0xff]
    %v106 = vld [vmem:[#allocation5 + $0xb0] sm:$0xff]
    %v107 = vld [vmem:[#allocation5 + $0xb8] sm:$0xff]
    %v108 = vld [vmem:[#allocation5 + $0xc0] sm:$0xff]
    %v109 = vld [vmem:[#allocation5 + $0xc8] sm:$0xff]
    %v110 = vld [vmem:[#allocation5 + $0xd0] sm:$0xff]
    %v111 = vld [vmem:[#allocation5 + $0xd8] sm:$0xff]
    %v112 = vld [vmem:[#allocation5 + $0xe0] sm:$0xff]
    %v113 = vld [vmem:[#allocation5 + $0xe8] sm:$0xff]
    %v114 = vld [vmem:[#allocation5 + $0xf0] sm:$0xff]
    %v115 = vld [vmem:[#allocation5 + $0xf8] sm:$0xff]
    %v116 = vld [vmem:[#allocation5 + $0x100] sm:$0xff]
    %v117 = vld [vmem:[#allocation5 + $0x108] sm:$0xff]
    %v118 = vld [vmem:[#allocation5 + $0x110] sm:$0xff]
    %v119 = vld [vmem:[#allocation5 + $0x118] sm:$0xff]
    %v120 = vld [vmem:[#allocation5 + $0x120] sm:$0xff]
    %v121 = vld [vmem:[#allocation5 + $0x128] sm:$0xff]
    %v122 = vld [vmem:[#allocation5 + $0x130] sm:$0xff]
    %v123 = vld [vmem:[#allocation5 + $0x138] sm:$0xff]
    %v124 = vld [vmem:[#allocation5 + $0x140] sm:$0xff]
    %v125 = vld [vmem:[#allocation5 + $0x148] sm:$0xff]
    %v126 = vld [vmem:[#allocation5 + $0x150] sm:$0xff]
    %v127 = vld [vmem:[#allocation5 + $0x158] sm:$0xff]
    %v128 = vld [vmem:[#allocation5 + $0x160] sm:$0xff]
    %v129 = vld [vmem:[#allocation5 + $0x168] sm:$0xff]
    %v130 = vld [vmem:[#allocation5 + $0x170] sm:$0xff]
    %v131 = vld [vmem:[#allocation5 + $0x178] sm:$0xff]
    %v132 = vld [vmem:[#allocation5 + $0x180] sm:$0xff]
    %v133 = vld [vmem:[#allocation5 + $0x188] sm:$0xff]
    %v134 = vld [vmem:[#allocation5 + $0x190] sm:$0xff]
    %v135 = vld [vmem:[#allocation5 + $0x198] sm:$0xff]
    %v136 = vld [vmem:[#allocation5 + $0x1a0] sm:$0xff]
    %v137 = vld [vmem:[#allocation5 + $0x1a8] sm:$0xff]
    %v138 = vld [vmem:[#allocation5 + $0x1b0] sm:$0xff]
    %v139 = vld [vmem:[#allocation5 + $0x1b8] sm:$0xff]
    %v140 = vld [vmem:[#allocation5 + $0x1c0] sm:$0xff]
    %v141 = vld [vmem:[#allocation5 + $0x1c8] sm:$0xff]
    %v142 = vld [vmem:[#allocation5 + $0x1d0] sm:$0xff]
    %v143 = vld [vmem:[#allocation5 + $0x1d8] sm:$0xff]
    %v144 = vld [vmem:[#allocation5 + $0x1e0] sm:$0xff]
    %v145 = vld [vmem:[#allocation5 + $0x1e8] sm:$0xff]
    %v146 = vld [vmem:[#allocation5 + $0x1f0] sm:$0xff]
    %v147 = vld [vmem:[#allocation5 + $0x1f8] sm:$0xff]
    %v148 = vld [vmem:[#allocation7] sm:$0xf]
    %v150 = vperm.slane %v148, 0
    %v151 = vperm.slane %v148, 1
    %v152 = vperm.slane %v148, 2
    %v153 = vperm.slane %v148, 3
    %158 = vmatpush.msra.mxu0 %v144
    %159 = vmatpush.msra.mxu0 %v140
    %160 = vmatpush.msra.mxu0 %v136
    %161 = vmatpush.msra.mxu0 %v132
    %162 = vmatpush.msra.mxu0 %v128
    %163 = vmatpush.msra.mxu0 %v124
    %164 = vmatpush.msra.mxu0 %v120
    %165 = vmatpush.msra.mxu0 %v116
    %166 = vmatpush.msra.mxu0 %v112
    %167 = vmatpush.msra.mxu0 %v108
    %168 = vmatpush.msra.mxu0 %v104
    %169 = vmatpush.msra.mxu0 %v100
    %170 = vmatpush.msra.mxu0 %v96
    %171 = vmatpush.msra.mxu0 %v92
    %172 = vmatpush.msra.mxu0 %v88
    %173 = vmatpush.msra.mxu0 %v84
    %174 = vmatmul.f32.gmra.mxu0 %v82
    %v175 = vpop.f32.mrf.mxu0
    %v176 = vadd.f32 %v150, %v175
    %177 = vmatmul.f32.gmra.mxu0 %v83
    %v178 = vpop.f32.mrf.mxu0
    %v179 = vadd.f32 %v150, %v178
    %180 = vdwg.mxu0
    %181 = vmatpush.msra.mxu0 %v145
    %182 = vmatpush.msra.mxu0 %v141
    %183 = vmatpush.msra.mxu0 %v137
    %184 = vmatpush.msra.mxu0 %v133
    %185 = vmatpush.msra.mxu0 %v129
    %186 = vmatpush.msra.mxu0 %v125
    %187 = vmatpush.msra.mxu0 %v121
    %188 = vmatpush.msra.mxu0 %v117
    %189 = vmatpush.msra.mxu0 %v113
    %190 = vmatpush.msra.mxu0 %v109
    %191 = vmatpush.msra.mxu0 %v105
    %192 = vmatpush.msra.mxu0 %v101
    %193 = vmatpush.msra.mxu0 %v97
    %194 = vmatpush.msra.mxu0 %v93
    %195 = vmatpush.msra.mxu0 %v89
    %196 = vmatpush.msra.mxu0 %v85
    %197 = vmatmul.f32.gmra.mxu0 %v82
    %v198 = vpop.f32.mrf.mxu0
    %v199 = vadd.f32 %v151, %v198
    %200 = vmatmul.f32.gmra.mxu0 %v83
    %v201 = vpop.f32.mrf.mxu0
    %v202 = vadd.f32 %v151, %v201
    %203 = vdwg.mxu0
    %204 = vmatpush.msra.mxu0 %v146
    %205 = vmatpush.msra.mxu0 %v142
    %206 = vmatpush.msra.mxu0 %v138
    %207 = vmatpush.msra.mxu0 %v134
    %208 = vmatpush.msra.mxu0 %v130
    %209 = vmatpush.msra.mxu0 %v126
    %210 = vmatpush.msra.mxu0 %v122
    %211 = vmatpush.msra.mxu0 %v118
    %212 = vmatpush.msra.mxu0 %v114
    %213 = vmatpush.msra.mxu0 %v110
    %214 = vmatpush.msra.mxu0 %v106
    %215 = vmatpush.msra.mxu0 %v102
    %216 = vmatpush.msra.mxu0 %v98
    %217 = vmatpush.msra.mxu0 %v94
    %218 = vmatpush.msra.mxu0 %v90
    %219 = vmatpush.msra.mxu0 %v86
    %220 = vmatmul.f32.gmra.mxu0 %v82
    %v221 = vpop.f32.mrf.mxu0
    %v222 = vadd.f32 %v152, %v221
    %223 = vmatmul.f32.gmra.mxu0 %v83
    %v224 = vpop.f32.mrf.mxu0
    %v225 = vadd.f32 %v152, %v224
    %226 = vdwg.mxu0
    %227 = vmatpush.msra.mxu0 %v147
    %228 = vmatpush.msra.mxu0 %v143
    %229 = vmatpush.msra.mxu0 %v139
    %230 = vmatpush.msra.mxu0 %v135
    %231 = vmatpush.msra.mxu0 %v131
    %232 = vmatpush.msra.mxu0 %v127
    %233 = vmatpush.msra.mxu0 %v123
    %234 = vmatpush.msra.mxu0 %v119
    %235 = vmatpush.msra.mxu0 %v115
    %236 = vmatpush.msra.mxu0 %v111
    %237 = vmatpush.msra.mxu0 %v107
    %238 = vmatpush.msra.mxu0 %v103
    %239 = vmatpush.msra.mxu0 %v99
    %240 = vmatpush.msra.mxu0 %v95
    %241 = vmatpush.msra.mxu0 %v91
    %242 = vmatpush.msra.mxu0 %v87
    %243 = vmatmul.f32.gmra.mxu0 %v82
    %v244 = vpop.f32.mrf.mxu0
    %v245 = vadd.f32 %v153, %v244
    %246 = vmatmul.f32.gmra.mxu0 %v83
    %v247 = vpop.f32.mrf.mxu0
    %v248 = vadd.f32 %v153, %v247
    %249 = vdwg.mxu0
    %v250 = vmax.f32 %v176, 0.0
    %v251 = vmax.f32 %v199, 0.0
    %v252 = vmax.f32 %v222, 0.0
    %v253 = vmax.f32 %v245, 0.0
    %v254 = vmax.f32 %v179, 0.0
    %v255 = vmax.f32 %v202, 0.0
    %v256 = vmax.f32 %v225, 0.0
    %v257 = vmax.f32 %v248, 0.0
    %v258 = vld [vmem:[#allocation8] sm:$0xff]
    %v259 = vld [vmem:[#allocation8 + $0x8] sm:$0xff]
    %v260 = vld [vmem:[#allocation8 + $0x10] sm:$0xff]
    %v261 = vld [vmem:[#allocation8 + $0x18] sm:$0xff]
    %v262 = vld [vmem:[#allocation8 + $0x20] sm:$0xff]
    %v263 = vld [vmem:[#allocation8 + $0x28] sm:$0xff]
    %v264 = vld [vmem:[#allocation8 + $0x30] sm:$0xff]
    %v265 = vld [vmem:[#allocation8 + $0x38] sm:$0xff]
    %v266 = vld [vmem:[#allocation8 + $0x40] sm:$0xff]
    %v267 = vld [vmem:[#allocation8 + $0x48] sm:$0xff]
    %v268 = vld [vmem:[#allocation8 + $0x50] sm:$0xff]
    %v269 = vld [vmem:[#allocation8 + $0x58] sm:$0xff]
    %v270 = vld [vmem:[#allocation8 + $0x60] sm:$0xff]
    %v271 = vld [vmem:[#allocation8 + $0x68] sm:$0xff]
    %v272 = vld [vmem:[#allocation8 + $0x70] sm:$0xff]
    %v273 = vld [vmem:[#allocation8 + $0x78] sm:$0xff]
    %v274 = vld [vmem:[#allocation8 + $0x80] sm:$0xff]
    %v275 = vld [vmem:[#allocation8 + $0x88] sm:$0xff]
    %v276 = vld [vmem:[#allocation8 + $0x90] sm:$0xff]
    %v277 = vld [vmem:[#allocation8 + $0x98] sm:$0xff]
    %v278 = vld [vmem:[#allocation8 + $0xa0] sm:$0xff]
    %v279 = vld [vmem:[#allocation8 + $0xa8] sm:$0xff]
    %v280 = vld [vmem:[#allocation8 + $0xb0] sm:$0xff]
    %v281 = vld [vmem:[#allocation8 + $0xb8] sm:$0xff]
    %v282 = vld [vmem:[#allocation8 + $0xc0] sm:$0xff]
    %v283 = vld [vmem:[#allocation8 + $0xc8] sm:$0xff]
    %v284 = vld [vmem:[#allocation8 + $0xd0] sm:$0xff]
    %v285 = vld [vmem:[#allocation8 + $0xd8] sm:$0xff]
    %v286 = vld [vmem:[#allocation8 + $0xe0] sm:$0xff]
    %v287 = vld [vmem:[#allocation8 + $0xe8] sm:$0xff]
    %v288 = vld [vmem:[#allocation8 + $0xf0] sm:$0xff]
    %v289 = vld [vmem:[#allocation8 + $0xf8] sm:$0xff]
    %v290 = vld [vmem:[#allocation8 + $0x100] sm:$0xff]
    %v291 = vld [vmem:[#allocation8 + $0x108] sm:$0xff]
    %v292 = vld [vmem:[#allocation8 + $0x110] sm:$0xff]
    %v293 = vld [vmem:[#allocation8 + $0x118] sm:$0xff]
    %v294 = vld [vmem:[#allocation8 + $0x120] sm:$0xff]
    %v295 = vld [vmem:[#allocation8 + $0x128] sm:$0xff]
    %v296 = vld [vmem:[#allocation8 + $0x130] sm:$0xff]
    %v297 = vld [vmem:[#allocation8 + $0x138] sm:$0xff]
    %v298 = vld [vmem:[#allocation8 + $0x140] sm:$0xff]
    %v299 = vld [vmem:[#allocation8 + $0x148] sm:$0xff]
    %v300 = vld [vmem:[#allocation8 + $0x150] sm:$0xff]
    %v301 = vld [vmem:[#allocation8 + $0x158] sm:$0xff]
    %v302 = vld [vmem:[#allocation8 + $0x160] sm:$0xff]
    %v303 = vld [vmem:[#allocation8 + $0x168] sm:$0xff]
    %v304 = vld [vmem:[#allocation8 + $0x170] sm:$0xff]
    %v305 = vld [vmem:[#allocation8 + $0x178] sm:$0xff]
    %v306 = vld [vmem:[#allocation8 + $0x180] sm:$0xff]
    %v307 = vld [vmem:[#allocation8 + $0x188] sm:$0xff]
    %v308 = vld [vmem:[#allocation8 + $0x190] sm:$0xff]
    %v309 = vld [vmem:[#allocation8 + $0x198] sm:$0xff]
    %v310 = vld [vmem:[#allocation8 + $0x1a0] sm:$0xff]
    %v311 = vld [vmem:[#allocation8 + $0x1a8] sm:$0xff]
    %v312 = vld [vmem:[#allocation8 + $0x1b0] sm:$0xff]
    %v313 = vld [vmem:[#allocation8 + $0x1b8] sm:$0xff]
    %v314 = vld [vmem:[#allocation8 + $0x1c0] sm:$0xff]
    %v315 = vld [vmem:[#allocation8 + $0x1c8] sm:$0xff]
    %v316 = vld [vmem:[#allocation8 + $0x1d0] sm:$0xff]
    %v317 = vld [vmem:[#allocation8 + $0x1d8] sm:$0xff]
    %v318 = vld [vmem:[#allocation8 + $0x1e0] sm:$0xff]
    %v319 = vld [vmem:[#allocation8 + $0x1e8] sm:$0xff]
    %v320 = vld [vmem:[#allocation8 + $0x1f0] sm:$0xff]
    %v321 = vld [vmem:[#allocation8 + $0x1f8] sm:$0xff]
    %v322 = vld [vmem:[%s4] sm:$0x1]
    %v324 = vperm.slane %v322, 0
    %326 = vmatpush.msra.mxu0 %v273
    %327 = vmatpush.msra.mxu0 %v272
    %328 = vmatpush.msra.mxu0 %v271
    %329 = vmatpush.msra.mxu0 %v270
    %330 = vmatpush.msra.mxu0 %v269
    %331 = vmatpush.msra.mxu0 %v268
    %332 = vmatpush.msra.mxu0 %v267
    %333 = vmatpush.msra.mxu0 %v266
    %334 = vmatpush.msra.mxu0 %v265
    %335 = vmatpush.msra.mxu0 %v264
    %336 = vmatpush.msra.mxu0 %v263
    %337 = vmatpush.msra.mxu0 %v262
    %338 = vmatpush.msra.mxu0 %v261
    %339 = vmatpush.msra.mxu0 %v260
    %340 = vmatpush.msra.mxu0 %v259
    %341 = vmatpush.msra.mxu0 %v258
    %342 = vmatmul.f32.gmra.mxu0 %v250
    %v343 = vpop.f32.mrf.mxu0
    %v344 = vadd.f32 %v324, %v343
    %345 = vmatmul.f32.gmra.mxu0 %v254
    %v346 = vpop.f32.mrf.mxu0
    %v347 = vadd.f32 %v324, %v346
    %348 = vdwg.mxu0
    %349 = vmatpush.msra.mxu0 %v289
    %350 = vmatpush.msra.mxu0 %v288
    %351 = vmatpush.msra.mxu0 %v287
    %352 = vmatpush.msra.mxu0 %v286
    %353 = vmatpush.msra.mxu0 %v285
    %354 = vmatpush.msra.mxu0 %v284
    %355 = vmatpush.msra.mxu0 %v283
    %356 = vmatpush.msra.mxu0 %v282
    %357 = vmatpush.msra.mxu0 %v281
    %358 = vmatpush.msra.mxu0 %v280
    %359 = vmatpush.msra.mxu0 %v279
    %360 = vmatpush.msra.mxu0 %v278
    %361 = vmatpush.msra.mxu0 %v277
    %362 = vmatpush.msra.mxu0 %v276
    %363 = vmatpush.msra.mxu0 %v275
    %364 = vmatpush.msra.mxu0 %v274
    %365 = vmatmul.f32.gmra.mxu0 %v251
    %v366 = vpop.f32.mrf.mxu0
    %v367 = vadd.f32 %v344, %v366
    %368 = vmatmul.f32.gmra.mxu0 %v255
    %v369 = vpop.f32.mrf.mxu0
    %v370 = vadd.f32 %v347, %v369
    %371 = vdwg.mxu0
    %372 = vmatpush.msra.mxu0 %v305
    %373 = vmatpush.msra.mxu0 %v304
    %374 = vmatpush.msra.mxu0 %v303
    %375 = vmatpush.msra.mxu0 %v302
    %376 = vmatpush.msra.mxu0 %v301
    %377 = vmatpush.msra.mxu0 %v300
    %378 = vmatpush.msra.mxu0 %v299
    %379 = vmatpush.msra.mxu0 %v298
    %380 = vmatpush.msra.mxu0 %v297
    %381 = vmatpush.msra.mxu0 %v296
    %382 = vmatpush.msra.mxu0 %v295
    %383 = vmatpush.msra.mxu0 %v294
    %384 = vmatpush.msra.mxu0 %v293
    %385 = vmatpush.msra.mxu0 %v292
    %386 = vmatpush.msra.mxu0 %v291
    %387 = vmatpush.msra.mxu0 %v290
    %388 = vmatmul.f32.gmra.mxu0 %v252
    %v389 = vpop.f32.mrf.mxu0
    %v390 = vadd.f32 %v367, %v389
    %391 = vmatmul.f32.gmra.mxu0 %v256
    %v392 = vpop.f32.mrf.mxu0
    %v393 = vadd.f32 %v370, %v392
    %394 = vdwg.mxu0
    %395 = vmatpush.msra.mxu0 %v321
    %396 = vmatpush.msra.mxu0 %v320
    %397 = vmatpush.msra.mxu0 %v319
    %398 = vmatpush.msra.mxu0 %v318
    %399 = vmatpush.msra.mxu0 %v317
    %400 = vmatpush.msra.mxu0 %v316
    %401 = vmatpush.msra.mxu0 %v315
    %402 = vmatpush.msra.mxu0 %v314
    %403 = vmatpush.msra.mxu0 %v313
    %404 = vmatpush.msra.mxu0 %v312
    %405 = vmatpush.msra.mxu0 %v311
    %406 = vmatpush.msra.mxu0 %v310
    %407 = vmatpush.msra.mxu0 %v309
    %408 = vmatpush.msra.mxu0 %v308
    %409 = vmatpush.msra.mxu0 %v307
    %410 = vmatpush.msra.mxu0 %v306
    %411 = vmatmul.f32.gmra.mxu0 %v253
    %v412 = vpop.f32.mrf.mxu0
    %v413 = vadd.f32 %v390, %v412
    %414 = vmatmul.f32.gmra.mxu0 %v257
    %v415 = vpop.f32.mrf.mxu0
    %v416 = vadd.f32 %v393, %v415
    %417 = vdwg.mxu0
    %418 = vst [vmem:[#allocation10] sm:$0xff] %v413
    %419 = vst [vmem:[#allocation10 + $0x8] sm:$0xff] %v416
    // Predicated region
    $region38: #{tpu_custom_call.1} parent=1 // pred_check
      _
    $region39: #{tpu_custom_call.1} parent=1 // pred_check_branch
      %421 = sbr.rel (0) target = $region41
    $region40: #{tpu_custom_call.1} parent=1 // pred_region
      %423 = vsyncadd [#allocation4], 0
      %s424 = sshll.u32 [#allocation10], 4
      %s425 = int_to_ptr.vmem [resolvable:$true] %s424
      %s426 = sshll.u32 %s5, 4
      %s427 = int_to_ptr.hbm [resolvable:$true] %s426
      %432 = dma.vmem_to_hbm [thread:$0]  %s425, 256, %s427, [#allocation4], 128, 128, 8
    $region41: #{tpu_custom_call.1} parent=1 // pred_fallthru
      _
    // Predicated region
    $region42: #{tpu_custom_call.1} parent=1 // pred_check
      _
    $region43: #{tpu_custom_call.1} parent=1 // pred_check_branch
      %434 = sbr.rel (0) target = $region45
    $region44: #{tpu_custom_call.1} parent=1 // pred_region
      %436 = dma.done [#allocation4], 256
    $region45: #{tpu_custom_call.1} parent=1 // pred_fallthru
      _
    %437 = vsyncpa [#allocation3], 1
    %438 = vsyncpa [#allocation6], 1
    %439 = vsyncpa [#allocation9], 1
    %440 = vsyncpa [#allocation4], 1

</llo_original>
